<compile_context>
chip_gen: v7x
topology: tpu7x:2x2x1
jax: 0.10.0
libtpu: 0.0.40
codegen_flags: <defaults>
</compile_context>

<pallas_src>
import jax
import jax.numpy as jnp
from jax.experimental import pallas as pl
from jax.experimental.pallas import tpu as pltpu


def se_block_kernel(x_ref, w1t_ref, w2t_ref, o_ref):
    # x_ref   : (TB, C, H)   batch tile, input dtype
    # w1t_ref : (C, C//r)    fc1 weight, pre-transposed to (in, out)
    # w2t_ref : (C//r, C)    fc2 weight, pre-transposed to (in, out)
    # o_ref   : (TB, C, H)
    x = x_ref[...]                                   # single VMEM->vreg read, reused below

    # Global average pool over H (AdaptiveAvgPool1d(1)); accumulate in f32.
    inv_h = jnp.float32(1.0 / x_ref.shape[-1])       # trace-time constant
    y = jnp.sum(x, axis=-1, dtype=jnp.float32) * inv_h          # (TB, C) f32

    # fc1 (bias-free) + ReLU — M = TB rows through the MXU.
    h = jnp.dot(y, w1t_ref[...], preferred_element_type=jnp.float32)   # (TB, C//r)
    h = jnp.maximum(h, 0.0)

    # fc2 (bias-free) + Sigmoid (exp lowers to the EUP slot).
    s = jnp.dot(h, w2t_ref[...], preferred_element_type=jnp.float32)   # (TB, C)
    s = jax.nn.sigmoid(s)

    # Channel-wise rescale in the input dtype, broadcast over H (lane dim).
    scale = s.astype(x.dtype)[:, :, None]                              # (TB, C, 1)
    o_ref[...] = (x * scale).astype(o_ref.dtype)


def _pick_batch_tile(B, C, H, itemsize, budget_bytes):
    """Largest divisor of B that fits the VMEM budget and keeps >= 2 grid steps."""
    bytes_per_b = 4 * C * H * itemsize                # 2 input + 2 output double buffers
    tb_cap = max(1, budget_bytes // bytes_per_b)
    if B >= 2:
        tb_cap = min(tb_cap, pl.cdiv(B, 2))           # >= 2 steps for the 2 v7x TCs
    tb_cap = int(min(tb_cap, B))
    for tb in range(tb_cap, 0, -1):                   # exact divisor -> no masked blocks
        if B % tb == 0:
            return tb
    return 1


def se_block(x, w1, w2, *, block_vmem_budget_bytes=24 * 1024 * 1024):
    """x: (B, C, H); w1: (C//r, C); w2: (C, C//r) in PyTorch Linear layout (out, in)."""
    B, C, H = x.shape
    hidden = w1.shape[0]
    itemsize = jnp.dtype(x.dtype).itemsize

    tb = _pick_batch_tile(B, C, H, itemsize, block_vmem_budget_bytes)
    grid = (B // tb,)

    # Pre-transpose the tiny weights (plain-JAX glue) so the kernel is y @ W.
    w1t = w1.T  # (C, hidden)
    w2t = w2.T  # (hidden, C)

    cost = pl.CostEstimate(
        flops=4 * B * C * hidden + 2 * B * C * H,      # two matmuls + pool + rescale
        transcendentals=B * C,                         # sigmoid exp
        bytes_accessed=2 * B * C * H * itemsize
        + 2 * C * hidden * jnp.dtype(w1.dtype).itemsize,
    )

    return pl.pallas_call(
        se_block_kernel,
        out_shape=jax.ShapeDtypeStruct((B, C, H), x.dtype),
        grid_spec=pltpu.PrefetchScalarGridSpec(
            num_scalar_prefetch=0,
            grid=grid,
            in_specs=[
                pl.BlockSpec((tb, C, H), lambda b: (b, 0, 0)),
                # Constant index maps: weights are DMA'd once, not per grid step.
                pl.BlockSpec((C, hidden), lambda b: (0, 0)),
                pl.BlockSpec((hidden, C), lambda b: (0, 0)),
            ],
            out_specs=pl.BlockSpec((tb, C, H), lambda b: (b, 0, 0)),
        ),
        compiler_params=pltpu.CompilerParams(
            dimension_semantics=("parallel",),
            vmem_limit_bytes=48 * 1024 * 1024,
        ),
        cost_estimate=cost,
    )(x, w1t, w2t)


def reference_se_block(x, w1, w2):
    # Pure-JAX reference mirroring the PyTorch module exactly (f32 precision).
    y = jnp.mean(x, axis=-1)                                               # (B, C)
    h = jnp.maximum(jnp.dot(y, w1.T, precision=jax.lax.Precision.HIGHEST), 0.0)
    s = jax.nn.sigmoid(jnp.dot(h, w2.T, precision=jax.lax.Precision.HIGHEST))
    return x * s[:, :, None]


if __name__ == "__main__":
    # Small but lane-dense shapes: H = 128 keeps every output store a full-lane vst.
    B, C, H = 8, 64, 128
    ratio = 16
    hidden = C // ratio  # = 4

    key = jax.random.PRNGKey(0)
    kx, k1, k2 = jax.random.split(key, 3)

    x = jax.random.normal(kx, (B, C, H), dtype=jnp.float32)
    # Deterministic synthetic weights in PyTorch Linear layout (out, in).
    bound1 = 1.0 / (C ** 0.5)
    bound2 = 1.0 / (hidden ** 0.5)
    w1 = jax.random.uniform(k1, (hidden, C), jnp.float32, -bound1, bound1)
    w2 = jax.random.uniform(k2, (C, hidden), jnp.float32, -bound2, bound2)

    out = se_block(x, w1, w2)
    out = jax.block_until_ready(out)

    ref = reference_se_block(x, w1, w2)
    assert out.shape == (B, C, H)
    assert jnp.allclose(out, ref, atol=1e-4, rtol=1e-4), "mismatch vs reference"

    print("KERNEL_OK")
</pallas_src>

<mosaic_0001>
module attributes {stable_mosaic.version = 11 : i64} {
  func.func @se_block_kernel(%arg0: i32, %arg1: memref<4x64x128xf32, #tpu.memory_space<vmem>>, %arg2: memref<64x4xf32, #tpu.memory_space<vmem>>, %arg3: memref<4x64xf32, #tpu.memory_space<vmem>>, %arg4: memref<4x64x128xf32, #tpu.memory_space<vmem>>) attributes {dimension_semantics = [#tpu.dimension_semantics<parallel>], iteration_bounds = array<i64: 2>, scalar_prefetch = 0 : i64, scratch_operands = 0 : i64, tpu.core_type = #tpu.core_type<tc>, window_params = [{transform_indices = @transform_0, window_bounds = array<i64: 4, 64, 128>}, {pipeline_mode = #tpu.pipeline_mode<synchronous>, transform_indices = @transform_1, window_bounds = array<i64: 64, 4>}, {pipeline_mode = #tpu.pipeline_mode<synchronous>, transform_indices = @transform_2, window_bounds = array<i64: 4, 64>}, {transform_indices = @transform_3, window_bounds = array<i64: 4, 64, 128>}]} {
    %c0 = arith.constant 0 : index
    %c0_0 = arith.constant 0 : index
    %c0_1 = arith.constant 0 : index
    %0 = vector.load %arg1[%c0, %c0_0, %c0_1] : memref<4x64x128xf32, #tpu.memory_space<vmem>>, vector<4x64x128xf32>
    %cst = arith.constant dense<0.000000e+00> : vector<4x64xf32>
    %1 = vector.multi_reduction <add>, %0, %cst [2] : vector<4x64x128xf32> to vector<4x64xf32>
    %cst_2 = arith.constant 7.812500e-03 : f32
    %2 = vector.broadcast %cst_2 : f32 to vector<4x64xf32>
    %3 = arith.mulf %1, %2 : vector<4x64xf32>
    %c0_3 = arith.constant 0 : index
    %c0_4 = arith.constant 0 : index
    %4 = vector.load %arg2[%c0_3, %c0_4] : memref<64x4xf32, #tpu.memory_space<vmem>>, vector<64x4xf32>
    %cst_5 = arith.constant dense<0.000000e+00> : vector<4x4xf32>
    %5 = tpu.matmul %3, %4, %cst_5 {dimension_numbers = #tpu.dot_dimension_numbers<[1], [0], [0], [1], [0, 0, 1, 1], [], []>} : vector<4x64xf32>, vector<64x4xf32>, vector<4x4xf32> -> vector<4x4xf32>
    %cst_6 = arith.constant 0.000000e+00 : f32
    %6 = vector.broadcast %cst_6 : f32 to vector<4x4xf32>
    %7 = arith.maximumf %5, %6 : vector<4x4xf32>
    %c0_7 = arith.constant 0 : index
    %c0_8 = arith.constant 0 : index
    %8 = vector.load %arg3[%c0_7, %c0_8] : memref<4x64xf32, #tpu.memory_space<vmem>>, vector<4x64xf32>
    %cst_9 = arith.constant dense<0.000000e+00> : vector<4x64xf32>
    %9 = tpu.matmul %7, %8, %cst_9 {dimension_numbers = #tpu.dot_dimension_numbers<[1], [0], [0], [1], [0, 0, 1, 1], [], []>} : vector<4x4xf32>, vector<4x64xf32>, vector<4x64xf32> -> vector<4x64xf32>
    %10 = arith.negf %9 : vector<4x64xf32>
    %11 = math.exp %10 : vector<4x64xf32>
    %cst_10 = arith.constant 1.000000e+00 : f32
    %12 = vector.broadcast %cst_10 : f32 to vector<4x64xf32>
    %13 = arith.addf %12, %11 : vector<4x64xf32>
    %14 = arith.divf %12, %13 : vector<4x64xf32>
    %15 = vector.shape_cast %14 : vector<4x64xf32> to vector<4x64x1xf32>
    %16 = vector.broadcast %15 : vector<4x64x1xf32> to vector<4x64x128xf32>
    %17 = arith.mulf %0, %16 : vector<4x64x128xf32>
    %c0_11 = arith.constant 0 : index
    %c0_12 = arith.constant 0 : index
    %c0_13 = arith.constant 0 : index
    %18 = vector.load %arg4[%c0_11, %c0_12, %c0_13] : memref<4x64x128xf32, #tpu.memory_space<vmem>>, vector<4x64x128xf32>
    tpu.vector_store %arg4[%c0_11, %c0_12, %c0_13], %17 {strides = array<i32>} : memref<4x64x128xf32, #tpu.memory_space<vmem>>, vector<4x64x128xf32>,
    return
  }
  func.func @transform_0(%arg0: i32) -> (i32, i32, i32) {
    %c0_i32 = arith.constant 0 : i32
    %c0_i32_0 = arith.constant 0 : i32
    %c0_i32_1 = arith.constant 0 : i32
    return %arg0, %c0_i32, %c0_i32_0 : i32, i32, i32
  }
  func.func @transform_1(%arg0: i32) -> (i32, i32) {
    %c0_i32 = arith.constant 0 : i32
    %c0_i32_0 = arith.constant 0 : i32
    %c0_i32_1 = arith.constant 0 : i32
    return %c0_i32, %c0_i32_0 : i32, i32
  }
  func.func @transform_2(%arg0: i32) -> (i32, i32) {
    %c0_i32 = arith.constant 0 : i32
    %c0_i32_0 = arith.constant 0 : i32
    %c0_i32_1 = arith.constant 0 : i32
    return %c0_i32, %c0_i32_0 : i32, i32
  }
  func.func @transform_3(%arg0: i32) -> (i32, i32, i32) {
    %c0_i32 = arith.constant 0 : i32
    %c0_i32_0 = arith.constant 0 : i32
    %c0_i32_1 = arith.constant 0 : i32
    return %arg0, %c0_i32, %c0_i32_0 : i32, i32, i32
  }
}

</mosaic_0001>

<llo_original>
// kernel: tpu_custom_call.1
$region0: #{tpu_custom_call.1}
  #allocation0 [shape = 'u32[]', space=smem, size = 0x4, offset = 0x4, fixed_abs, tag = 'smem constant byte address 0x4 - core index']
  #allocation1 [shape = 'u32[144,128]{1,0:T(1,128)}', space=vmem, size = 0x12000, scoped, tag = 'internal scratch']
  %s0 = inlined_call_operand.hbm [shape: f32[8,64,128], index: 0, kind: input, shape index: {}]
  %s1 = inlined_call_operand.vmem [shape: f32[64,4], index: 1, kind: input, shape index: {}]
  %s2 = inlined_call_operand.vmem [shape: f32[4,64], index: 2, kind: input, shape index: {}]
  %s3 = inlined_call_operand.hbm [shape: f32[8,64,128], index: 3, kind: output, shape index: {}]
  %s4 = sld [smem:[#allocation0]]
  $region49: #{tpu_custom_call.1} parent=0
    _
  %s6 = ssub.s32 1, %s4
  %s7 = scalar_select 0, %s6, %s4
  $region1: #{tpu_custom_call.1} parent=0
    #allocation2 [shape = 'u8[262144]{0}', space=vmem, size = 0x40000, scoped, tag = 'input window, operand 0']
    #allocation3 [shape = 's32[2]{0}', space=sflag, size = 0x8, scoped, tag = 'scoped memory for tpu_custom_call.1']
    #allocation4 [shape = 's32[2]{0}', space=sflag, size = 0x8, scoped, tag = 'scoped memory for tpu_custom_call.1']
    #allocation5 [shape = 'u8[262144]{0}', space=vmem, size = 0x40000, scoped, tag = 'output window, operand 0']
    %8 = vsyncpa [#allocation3], 0
    %s9 = scalar_lea.sflag [#allocation3], 1
    %10 = vsyncpa %s9, 0
    %11 = vsyncpa [#allocation4], 0
    %s12 = scalar_lea.sflag [#allocation4], 1
    %13 = vsyncpa %s12, 0
    loop: start=0, step=1, limit=4
    $region2: #{tpu_custom_call.1} parent=1 // loop_pre_header
      _
    $region3: #{tpu_custom_call.1} parent=1 // loop_header
      %s15 = sphi 0, %s19
      %p16 = scmp.ge.s32.totalorder %s15, 4
      %s25 = sphi 0, %s27
      %s28 = sphi 0, %s25
      %s29 = sphi 0, %s28
      %s45 = sphi 0, %s29
      %s49 = sphi 0, %s49
      %s51 = sphi 0, %s49
      %s52 = sphi 0, %s51
      %s66 = sphi 0, %s52
      %s70 = sphi 0, %s70
      %s72 = sphi 0, %s70
      %s73 = sphi 0, %s72
      %s87 = sphi 0, %s73
      %s93 = sphi 0, %s95
      %s96 = sphi 0, %s93
      %s97 = sphi 0, %s96
      %s113 = sphi 0, %s97
    $region4: #{tpu_custom_call.1} parent=1 // loop_header_branch
      %18 = sbr.rel (%p16) target = $region8
    $region5: #{tpu_custom_call.1} parent=1 // loop_body
      %s20 = ssub.s32 %s15, 1
      %s21 = ssub.s32 %s15, 2
      %s22 = sadd.s32 %s15, 1
      %s23 = ssub.s32 %s15, %s22
      %p24 = scmp.eq.s32.totalorder %s23, 0
      %s26 = sadd.s32 %s25, 1
      %s27 = scalar_select %p24, %s25, %s26
      %p30 = pneg %p24
      %p31 = scmp.eq.s32.totalorder %s15, 1
      %p32 = por %p30, %p31
      %p33 = scmp.ne.s32.totalorder %s25, %s28
      %p34 = scmp.eq.s32.totalorder %s15, 0
      %p35 = por %p33, %p34
      %p36 = scmp.ne.s32.totalorder %s25, %s28
      %p37 = scmp.eq.s32.totalorder %s20, 1
      %p38 = por %p36, %p37
      %p39 = scmp.ne.s32.totalorder %s28, %s29
      %p40 = scmp.eq.s32.totalorder %s20, 0
      %p41 = por %p39, %p40
      %p42 = scmp.ne.s32.totalorder %s28, %s29
      %p43 = scmp.eq.s32.totalorder %s21, 1
      %p44 = por %p42, %p43
      %p46 = scmp.ne.s32.totalorder %s29, %s45
      %p47 = scmp.eq.s32.totalorder %s21, 0
      %p48 = por %p46, %p47
      %s50 = sadd.s32 %s49, 1
      %p53 = scmp.eq.s32.totalorder %s15, 1
      %p54 = scmp.ne.s32.totalorder %s49, %s51
      %p55 = scmp.eq.s32.totalorder %s15, 0
      %p56 = por %p54, %p55
      %p57 = scmp.ne.s32.totalorder %s49, %s51
      %p58 = scmp.eq.s32.totalorder %s20, 1
      %p59 = por %p57, %p58
      %p60 = scmp.ne.s32.totalorder %s51, %s52
      %p61 = scmp.eq.s32.totalorder %s20, 0
      %p62 = por %p60, %p61
      %p63 = scmp.ne.s32.totalorder %s51, %s52
      %p64 = scmp.eq.s32.totalorder %s21, 1
      %p65 = por %p63, %p64
      %p67 = scmp.ne.s32.totalorder %s52, %s66
      %p68 = scmp.eq.s32.totalorder %s21, 0
      %p69 = por %p67, %p68
      %s71 = sadd.s32 %s70, 1
      %p74 = scmp.eq.s32.totalorder %s15, 1
      %p75 = scmp.ne.s32.totalorder %s70, %s72
      %p76 = scmp.eq.s32.totalorder %s15, 0
      %p77 = por %p75, %p76
      %p78 = scmp.ne.s32.totalorder %s70, %s72
      %p79 = scmp.eq.s32.totalorder %s20, 1
      %p80 = por %p78, %p79
      %p81 = scmp.ne.s32.totalorder %s72, %s73
      %p82 = scmp.eq.s32.totalorder %s20, 0
      %p83 = por %p81, %p82
      %p84 = scmp.ne.s32.totalorder %s72, %s73
      %p85 = scmp.eq.s32.totalorder %s21, 1
      %p86 = por %p84, %p85
      %p88 = scmp.ne.s32.totalorder %s73, %s87
      %p89 = scmp.eq.s32.totalorder %s21, 0
      %p90 = por %p88, %p89
      %s91 = ssub.s32 %s15, %s22
      %p92 = scmp.eq.s32.totalorder %s91, 0
      %s94 = sadd.s32 %s93, 1
      %s95 = scalar_select %p92, %s93, %s94
      %p98 = pneg %p92
      %p99 = scmp.eq.s32.totalorder %s15, 1
      %p100 = por %p98, %p99
      %p101 = scmp.ne.s32.totalorder %s93, %s96
      %p102 = scmp.eq.s32.totalorder %s15, 0
      %p103 = por %p101, %p102
      %p104 = scmp.ne.s32.totalorder %s93, %s96
      %p105 = scmp.eq.s32.totalorder %s20, 1
      %p106 = por %p104, %p105
      %p107 = scmp.ne.s32.totalorder %s96, %s97
      %p108 = scmp.eq.s32.totalorder %s20, 0
      %p109 = por %p107, %p108
      %p110 = scmp.ne.s32.totalorder %s96, %s97
      %p111 = scmp.eq.s32.totalorder %s21, 1
      %p112 = por %p110, %p111
      %p114 = scmp.ne.s32.totalorder %s97, %s113
      %p115 = scmp.eq.s32.totalorder %s21, 0
      %p116 = por %p114, %p115
      %p117 = scmp.le.s32.totalorder 1, %s15
      %p118 = scmp.lt.s32.totalorder %s15, 3
      %p119 = pnand %p117, %p118
      %p120 = pneg %p119
      // Predicated region
      $region9: #{tpu_custom_call.1} parent=5 // pred_check
        _
      $region10: #{tpu_custom_call.1} parent=5 // pred_check_branch
        %122 = sbr.rel (%p119) target = $region12
      $region11: #{tpu_custom_call.1} parent=5 // pred_region
        %s123 = ssub.s32 %s15, 1
        // Predicated region
        $region13: #{tpu_custom_call.1} parent=11 // pred_check
          %p124 = pneg %p62
        $region14: #{tpu_custom_call.1} parent=11 // pred_check_branch
          %126 = sbr.rel (%p124) target = $region16
        $region15: #{tpu_custom_call.1} parent=11 // pred_region
          _
        $region16: #{tpu_custom_call.1} parent=11 // pred_fallthru
          _
        // Predicated region
        $region17: #{tpu_custom_call.1} parent=11 // pred_check
          %p127 = pneg %p83
        $region18: #{tpu_custom_call.1} parent=11 // pred_check_branch
          %129 = sbr.rel (%p127) target = $region20
        $region19: #{tpu_custom_call.1} parent=11 // pred_region
          _
        $region20: #{tpu_custom_call.1} parent=11 // pred_fallthru
          _
      $region12: #{tpu_custom_call.1} parent=5 // pred_fallthru
        _
      %p130 = scmp.lt.s32.totalorder %s15, 2
      // Predicated region
      $region21: #{tpu_custom_call.1} parent=5 // pred_check
        %p131 = pneg %p130
      $region22: #{tpu_custom_call.1} parent=5 // pred_check_branch
        %133 = sbr.rel (%p131) target = $region24
      $region23: #{tpu_custom_call.1} parent=5 // pred_region
        // Predicated region
        $region25: #{tpu_custom_call.1} parent=23 // pred_check
          %p134 = pneg %p35
        $region26: #{tpu_custom_call.1} parent=23 // pred_check_branch
          %136 = sbr.rel (%p134) target = $region28
        $region27: #{tpu_custom_call.1} parent=23 // pred_region
          %s137 = sand.u32 %s25, 1
          %s138 = scalar_lea.sflag [#allocation3], %s137
          %s139 = sand.u32 %s25, 1
          %s140 = smul.addr %s139, 256
          %s141 = scalar_lea.vmem [#allocation2], %s140
          %s142 = smul.u32 4, %s15
          %s144 = ssub.s32 4096, 4096
          %145 = vsyncadd %s138, %s144
          %s146 = smul.addr %s142, 8
          %s147 = smul.addr %s146, 128
          %s148 = scalar_lea.hbm %s0, %s147
          %s149 = sshll.u32 %s141, 4
          %s150 = int_to_ptr.vmem [resolvable:$true] %s149
          %155 = dma.hbm_to_vmem [thread:$0]  %s148, 4096, %s150, %s138, 128, 128, 8
        $region28: #{tpu_custom_call.1} parent=23 // pred_fallthru
          _
      $region24: #{tpu_custom_call.1} parent=5 // pred_fallthru
        _
      %p156 = scmp.le.s32.totalorder 1, %s15
      %p157 = scmp.lt.s32.totalorder %s15, 3
      %p158 = pnand %p156, %p157
      %p159 = pneg %p158
      // Predicated region
      $region29: #{tpu_custom_call.1} parent=5 // pred_check
        _
      $region30: #{tpu_custom_call.1} parent=5 // pred_check_branch
        %161 = sbr.rel (%p158) target = $region32
      $region31: #{tpu_custom_call.1} parent=5 // pred_region
        %s162 = ssub.s32 %s15, 1
        %s163 = sand.u32 %s28, 1
        %s164 = scalar_lea.sflag [#allocation3], %s163
        %s165 = sand.u32 %s28, 1
        %s166 = smul.addr %s165, 256
        %s167 = scalar_lea.vmem [#allocation2], %s166
        // Predicated region
        $region33: #{tpu_custom_call.1} parent=31 // pred_check
          %p168 = pneg %p41
        $region34: #{tpu_custom_call.1} parent=31 // pred_check_branch
          %170 = sbr.rel (%p168) target = $region36
        $region35: #{tpu_custom_call.1} parent=31 // pred_region
          %171 = dma.done %s164, 4096
        $region36: #{tpu_custom_call.1} parent=31 // pred_fallthru
          _
        %s172 = sand.u32 %s28, 1
        %s173 = scalar_lea.sflag [#allocation3], %s172
        %s174 = sand.u32 %s28, 1
        %s175 = smul.addr %s174, 256
        %s176 = scalar_lea.vmem [#allocation2], %s175
        %p177 = pneg %p41
        %p178 = pneg %p38
        %p179 = pneg %p62
        %p180 = pneg %p59
        %p181 = pneg %p83
        %p182 = pneg %p80
        %p183 = pneg %p109
        %p184 = pneg %p106
        %s185 = sand.u32 %s96, 1
        %s186 = scalar_lea.sflag [#allocation4], %s185
        %s187 = sand.u32 %s96, 1
        %s188 = smul.addr %s187, 256
        %s189 = scalar_lea.vmem [#allocation5], %s188
        %s190 = smul.u32 4, %s20
        %s191 = smul.u32 4, %s20
        %v192 = vld [vmem:[%s167] sm:$0xff]
        %v193 = vld [vmem:[%s167 + $0x8] sm:$0xff]
        %v194 = vld [vmem:[%s167 + $0x10] sm:$0xff]
        %v195 = vld [vmem:[%s167 + $0x18] sm:$0xff]
        %v196 = vld [vmem:[%s167 + $0x20] sm:$0xff]
        %v197 = vld [vmem:[%s167 + $0x28] sm:$0xff]
        %v198 = vld [vmem:[%s167 + $0x30] sm:$0xff]
        %v199 = vld [vmem:[%s167 + $0x38] sm:$0xff]
        %v200 = vld [vmem:[%s167 + $0x40] sm:$0xff]
        %v201 = vld [vmem:[%s167 + $0x48] sm:$0xff]
        %v202 = vld [vmem:[%s167 + $0x50] sm:$0xff]
        %v203 = vld [vmem:[%s167 + $0x58] sm:$0xff]
        %v204 = vld [vmem:[%s167 + $0x60] sm:$0xff]
        %v205 = vld [vmem:[%s167 + $0x68] sm:$0xff]
        %v206 = vld [vmem:[%s167 + $0x70] sm:$0xff]
        %v207 = vld [vmem:[%s167 + $0x78] sm:$0xff]
        %v208 = vld [vmem:[%s167 + $0x80] sm:$0xff]
        %v209 = vld [vmem:[%s167 + $0x88] sm:$0xff]
        %v210 = vld [vmem:[%s167 + $0x90] sm:$0xff]
        %v211 = vld [vmem:[%s167 + $0x98] sm:$0xff]
        %v212 = vld [vmem:[%s167 + $0xa0] sm:$0xff]
        %v213 = vld [vmem:[%s167 + $0xa8] sm:$0xff]
        %v214 = vld [vmem:[%s167 + $0xb0] sm:$0xff]
        %v215 = vld [vmem:[%s167 + $0xb8] sm:$0xff]
        %v216 = vld [vmem:[%s167 + $0xc0] sm:$0xff]
        %v217 = vld [vmem:[%s167 + $0xc8] sm:$0xff]
        %v218 = vld [vmem:[%s167 + $0xd0] sm:$0xff]
        %v219 = vld [vmem:[%s167 + $0xd8] sm:$0xff]
        %v220 = vld [vmem:[%s167 + $0xe0] sm:$0xff]
        %v221 = vld [vmem:[%s167 + $0xe8] sm:$0xff]
        %v222 = vld [vmem:[%s167 + $0xf0] sm:$0xff]
        %v223 = vld [vmem:[%s167 + $0xf8] sm:$0xff]
        %224 = vadd.xlane.f32.xlu0 %v192
        %v225 = vpop.xlane.xlu0 %224
        %226 = vadd.xlane.f32.xlu0 %v193
        %v227 = vpop.xlane.xlu0 %226
        %228 = vadd.xlane.f32.xlu0 %v194
        %v229 = vpop.xlane.xlu0 %228
        %230 = vadd.xlane.f32.xlu0 %v195
        %v231 = vpop.xlane.xlu0 %230
        %232 = vadd.xlane.f32.xlu0 %v196
        %v233 = vpop.xlane.xlu0 %232
        %234 = vadd.xlane.f32.xlu0 %v197
        %v235 = vpop.xlane.xlu0 %234
        %236 = vadd.xlane.f32.xlu0 %v198
        %v237 = vpop.xlane.xlu0 %236
        %238 = vadd.xlane.f32.xlu0 %v199
        %v239 = vpop.xlane.xlu0 %238
        %240 = vadd.xlane.f32.xlu0 %v200
        %v241 = vpop.xlane.xlu0 %240
        %242 = vadd.xlane.f32.xlu0 %v201
        %v243 = vpop.xlane.xlu0 %242
        %244 = vadd.xlane.f32.xlu0 %v202
        %v245 = vpop.xlane.xlu0 %244
        %246 = vadd.xlane.f32.xlu0 %v203
        %v247 = vpop.xlane.xlu0 %246
        %248 = vadd.xlane.f32.xlu0 %v204
        %v249 = vpop.xlane.xlu0 %248
        %250 = vadd.xlane.f32.xlu0 %v205
        %v251 = vpop.xlane.xlu0 %250
        %252 = vadd.xlane.f32.xlu0 %v206
        %v253 = vpop.xlane.xlu0 %252
        %254 = vadd.xlane.f32.xlu0 %v207
        %v255 = vpop.xlane.xlu0 %254
        %256 = vadd.xlane.f32.xlu0 %v208
        %v257 = vpop.xlane.xlu0 %256
        %258 = vadd.xlane.f32.xlu0 %v209
        %v259 = vpop.xlane.xlu0 %258
        %260 = vadd.xlane.f32.xlu0 %v210
        %v261 = vpop.xlane.xlu0 %260
        %262 = vadd.xlane.f32.xlu0 %v211
        %v263 = vpop.xlane.xlu0 %262
        %264 = vadd.xlane.f32.xlu0 %v212
        %v265 = vpop.xlane.xlu0 %264
        %266 = vadd.xlane.f32.xlu0 %v213
        %v267 = vpop.xlane.xlu0 %266
        %268 = vadd.xlane.f32.xlu0 %v214
        %v269 = vpop.xlane.xlu0 %268
        %270 = vadd.xlane.f32.xlu0 %v215
        %v271 = vpop.xlane.xlu0 %270
        %272 = vadd.xlane.f32.xlu0 %v216
        %v273 = vpop.xlane.xlu0 %272
        %274 = vadd.xlane.f32.xlu0 %v217
        %v275 = vpop.xlane.xlu0 %274
        %276 = vadd.xlane.f32.xlu0 %v218
        %v277 = vpop.xlane.xlu0 %276
        %278 = vadd.xlane.f32.xlu0 %v219
        %v279 = vpop.xlane.xlu0 %278
        %280 = vadd.xlane.f32.xlu0 %v220
        %v281 = vpop.xlane.xlu0 %280
        %282 = vadd.xlane.f32.xlu0 %v221
        %v283 = vpop.xlane.xlu0 %282
        %284 = vadd.xlane.f32.xlu0 %v222
        %v285 = vpop.xlane.xlu0 %284
        %286 = vadd.xlane.f32.xlu0 %v223
        %v287 = vpop.xlane.xlu0 %286
        %v288 = vmul.f32 %v225, 0.0078125
        %v289 = vmul.f32 %v227, 0.0078125
        %v290 = vmul.f32 %v229, 0.0078125
        %v291 = vmul.f32 %v231, 0.0078125
        %v292 = vmul.f32 %v233, 0.0078125
        %v293 = vmul.f32 %v235, 0.0078125
        %v294 = vmul.f32 %v237, 0.0078125
        %v295 = vmul.f32 %v239, 0.0078125
        %v296 = vmul.f32 %v241, 0.0078125
        %v297 = vmul.f32 %v243, 0.0078125
        %v298 = vmul.f32 %v245, 0.0078125
        %v299 = vmul.f32 %v247, 0.0078125
        %v300 = vmul.f32 %v249, 0.0078125
        %v301 = vmul.f32 %v251, 0.0078125
        %v302 = vmul.f32 %v253, 0.0078125
        %v303 = vmul.f32 %v255, 0.0078125
        %v304 = vmul.f32 %v257, 0.0078125
        %v305 = vmul.f32 %v259, 0.0078125
        %v306 = vmul.f32 %v261, 0.0078125
        %v307 = vmul.f32 %v263, 0.0078125
        %v308 = vmul.f32 %v265, 0.0078125
        %v309 = vmul.f32 %v267, 0.0078125
        %v310 = vmul.f32 %v269, 0.0078125
        %v311 = vmul.f32 %v271, 0.0078125
        %v312 = vmul.f32 %v273, 0.0078125
        %v313 = vmul.f32 %v275, 0.0078125
        %v314 = vmul.f32 %v277, 0.0078125
        %v315 = vmul.f32 %v279, 0.0078125
        %v316 = vmul.f32 %v281, 0.0078125
        %v317 = vmul.f32 %v283, 0.0078125
        %v318 = vmul.f32 %v285, 0.0078125
        %v319 = vmul.f32 %v287, 0.0078125
        %v320 = vld [vmem:[%s1] sm:$0xff]
        %v321 = vld [vmem:[%s1 + $0x8] sm:$0xff]
        %v322 = vld [vmem:[%s1 + $0x10] sm:$0xff]
        %v323 = vld [vmem:[%s1 + $0x18] sm:$0xff]
        %v324 = vld [vmem:[%s1 + $0x20] sm:$0xff]
        %v325 = vld [vmem:[%s1 + $0x28] sm:$0xff]
        %v326 = vld [vmem:[%s1 + $0x30] sm:$0xff]
        %v327 = vld [vmem:[%s1 + $0x38] sm:$0xff]
        %v360 = vlaneseq
        %v361 = vand.u32 %v360, 127
        %v362 = vlaneseq
        %v363 = vshrl.u32 %v362, 7
        %v364 = vsub.s32 %v361, %v363
        %v365 = vrot.slane %v288, %v364
        %v366 = vadd.s32 %v361, 4294967288
        %v367 = vlaneseq
        %v368 = vshrl.u32 %v367, 7
        %v369 = vsub.s32 %v366, %v368
        %v370 = vrot.slane %v289, %v369
        %vm371 = vcmask 130112
        %v372 = vsel %vm371, %v370, %v365
        %v373 = vadd.s32 %v361, 4294967280
        %v374 = vlaneseq
        %v375 = vshrl.u32 %v374, 7
        %v376 = vsub.s32 %v373, %v375
        %v377 = vrot.slane %v290, %v376
        %vm378 = vcmask 195712
        %v379 = vsel %vm378, %v377, %v372
        %v380 = vadd.s32 %v361, 4294967272
        %v381 = vlaneseq
        %v382 = vshrl.u32 %v381, 7
        %v383 = vsub.s32 %v380, %v382
        %v384 = vrot.slane %v291, %v383
        %vm385 = vcmask 261312
        %v386 = vsel %vm385, %v384, %v379
        %v387 = vadd.s32 %v361, 4294967264
        %v388 = vlaneseq
        %v389 = vshrl.u32 %v388, 7
        %v390 = vsub.s32 %v387, %v389
        %v391 = vrot.slane %v292, %v390
        %vm392 = vcmask 326912
        %v393 = vsel %vm392, %v391, %v386
        %v394 = vadd.s32 %v361, 4294967256
        %v395 = vlaneseq
        %v396 = vshrl.u32 %v395, 7
        %v397 = vsub.s32 %v394, %v396
        %v398 = vrot.slane %v293, %v397
        %vm399 = vcmask 392512
        %v400 = vsel %vm399, %v398, %v393
        %v401 = vadd.s32 %v361, 4294967248
        %v402 = vlaneseq
        %v403 = vshrl.u32 %v402, 7
        %v404 = vsub.s32 %v401, %v403
        %v405 = vrot.slane %v294, %v404
        %vm406 = vcmask 458112
        %v407 = vsel %vm406, %v405, %v400
        %v408 = vadd.s32 %v361, 4294967240
        %v409 = vlaneseq
        %v410 = vshrl.u32 %v409, 7
        %v411 = vsub.s32 %v408, %v410
        %v412 = vrot.slane %v295, %v411
        %vm413 = vcmask 523712
        %v414 = vsel %vm413, %v412, %v407
        %v415 = vlaneseq
        %v416 = vshrl.u32 %v415, 7
        %v417 = vsub.s32 %v361, %v416
        %v418 = vrot.slane %v296, %v417
        %v419 = vlaneseq
        %v420 = vshrl.u32 %v419, 7
        %v421 = vsub.s32 %v366, %v420
        %v422 = vrot.slane %v297, %v421
        %v423 = vsel %vm371, %v422, %v418
        %v424 = vlaneseq
        %v425 = vshrl.u32 %v424, 7
        %v426 = vsub.s32 %v373, %v425
        %v427 = vrot.slane %v298, %v426
        %v428 = vsel %vm378, %v427, %v423
        %v429 = vlaneseq
        %v430 = vshrl.u32 %v429, 7
        %v431 = vsub.s32 %v380, %v430
        %v432 = vrot.slane %v299, %v431
        %v433 = vsel %vm385, %v432, %v428
        %v434 = vlaneseq
        %v435 = vshrl.u32 %v434, 7
        %v436 = vsub.s32 %v387, %v435
        %v437 = vrot.slane %v300, %v436
        %v438 = vsel %vm392, %v437, %v433
        %v439 = vlaneseq
        %v440 = vshrl.u32 %v439, 7
        %v441 = vsub.s32 %v394, %v440
        %v442 = vrot.slane %v301, %v441
        %v443 = vsel %vm399, %v442, %v438
        %v444 = vlaneseq
        %v445 = vshrl.u32 %v444, 7
        %v446 = vsub.s32 %v401, %v445
        %v447 = vrot.slane %v302, %v446
        %v448 = vsel %vm406, %v447, %v443
        %v449 = vlaneseq
        %v450 = vshrl.u32 %v449, 7
        %v451 = vsub.s32 %v408, %v450
        %v452 = vrot.slane %v303, %v451
        %v453 = vsel %vm413, %v452, %v448
        %v454 = vlaneseq
        %v455 = vshrl.u32 %v454, 7
        %v456 = vsub.s32 %v361, %v455
        %v457 = vrot.slane %v304, %v456
        %v458 = vlaneseq
        %v459 = vshrl.u32 %v458, 7
        %v460 = vsub.s32 %v366, %v459
        %v461 = vrot.slane %v305, %v460
        %v462 = vsel %vm371, %v461, %v457
        %v463 = vlaneseq
        %v464 = vshrl.u32 %v463, 7
        %v465 = vsub.s32 %v373, %v464
        %v466 = vrot.slane %v306, %v465
        %v467 = vsel %vm378, %v466, %v462
        %v468 = vlaneseq
        %v469 = vshrl.u32 %v468, 7
        %v470 = vsub.s32 %v380, %v469
        %v471 = vrot.slane %v307, %v470
        %v472 = vsel %vm385, %v471, %v467
        %v473 = vlaneseq
        %v474 = vshrl.u32 %v473, 7
        %v475 = vsub.s32 %v387, %v474
        %v476 = vrot.slane %v308, %v475
        %v477 = vsel %vm392, %v476, %v472
        %v478 = vlaneseq
        %v479 = vshrl.u32 %v478, 7
        %v480 = vsub.s32 %v394, %v479
        %v481 = vrot.slane %v309, %v480
        %v482 = vsel %vm399, %v481, %v477
        %v483 = vlaneseq
        %v484 = vshrl.u32 %v483, 7
        %v485 = vsub.s32 %v401, %v484
        %v486 = vrot.slane %v310, %v485
        %v487 = vsel %vm406, %v486, %v482
        %v488 = vlaneseq
        %v489 = vshrl.u32 %v488, 7
        %v490 = vsub.s32 %v408, %v489
        %v491 = vrot.slane %v311, %v490
        %v492 = vsel %vm413, %v491, %v487
        %v493 = vlaneseq
        %v494 = vshrl.u32 %v493, 7
        %v495 = vsub.s32 %v361, %v494
        %v496 = vrot.slane %v312, %v495
        %v497 = vlaneseq
        %v498 = vshrl.u32 %v497, 7
        %v499 = vsub.s32 %v366, %v498
        %v500 = vrot.slane %v313, %v499
        %v501 = vsel %vm371, %v500, %v496
        %v502 = vlaneseq
        %v503 = vshrl.u32 %v502, 7
        %v504 = vsub.s32 %v373, %v503
        %v505 = vrot.slane %v314, %v504
        %v506 = vsel %vm378, %v505, %v501
        %v507 = vlaneseq
        %v508 = vshrl.u32 %v507, 7
        %v509 = vsub.s32 %v380, %v508
        %v510 = vrot.slane %v315, %v509
        %v511 = vsel %vm385, %v510, %v506
        %v512 = vlaneseq
        %v513 = vshrl.u32 %v512, 7
        %v514 = vsub.s32 %v387, %v513
        %v515 = vrot.slane %v316, %v514
        %v516 = vsel %vm392, %v515, %v511
        %v517 = vlaneseq
        %v518 = vshrl.u32 %v517, 7
        %v519 = vsub.s32 %v394, %v518
        %v520 = vrot.slane %v317, %v519
        %v521 = vsel %vm399, %v520, %v516
        %v522 = vlaneseq
        %v523 = vshrl.u32 %v522, 7
        %v524 = vsub.s32 %v401, %v523
        %v525 = vrot.slane %v318, %v524
        %v526 = vsel %vm406, %v525, %v521
        %v527 = vlaneseq
        %v528 = vshrl.u32 %v527, 7
        %v529 = vsub.s32 %v408, %v528
        %v530 = vrot.slane %v319, %v529
        %v531 = vsel %vm413, %v530, %v526
        %vm532 = vcmask 1041409
        %v533 = vsel %vm532, %v453, %v414
        %vm534 = vcmask 1042434
        %v535 = vsel %vm534, %v492, %v533
        %vm536 = vcmask 1043459
        %v537 = vsel %vm536, %v531, %v535
        %vm538 = vcmask 523264
        %v539 = vsel %vm538, %v537, 0
        %541 = vmatprep.subr.mxu0 0.0
        %542 = vmatpush1.msra.mxu0 %v320
        %543 = vmatprep.subr.mxu0 0.0
        %544 = vmatpush1.msra.mxu0 %v321
        %545 = vmatprep.subr.mxu0 0.0
        %546 = vmatpush1.msra.mxu0 %v322
        %547 = vmatprep.subr.mxu0 0.0
        %548 = vmatpush1.msra.mxu0 %v323
        %549 = vmatprep.subr.mxu0 0.0
        %550 = vmatpush1.msra.mxu0 %v324
        %551 = vmatprep.subr.mxu0 0.0
        %552 = vmatpush1.msra.mxu0 %v325
        %553 = vmatprep.subr.mxu0 0.0
        %554 = vmatpush1.msra.mxu0 %v326
        %555 = vmatprep.subr.mxu0 0.0
        %556 = vmatpush1.msra.mxu0 %v327
        %557 = vmatprep.subr.mxu0 0.0
        %558 = vmatpush1.msra.mxu0 0.0
        %559 = vmatprep.subr.mxu0 0.0
        %560 = vmatpush1.msra.mxu0 0.0
        %561 = vmatprep.subr.mxu0 0.0
        %562 = vmatpush1.msra.mxu0 0.0
        %563 = vmatprep.subr.mxu0 0.0
        %564 = vmatpush1.msra.mxu0 0.0
        %565 = vmatprep.subr.mxu0 0.0
        %566 = vmatpush1.msra.mxu0 0.0
        %567 = vmatprep.subr.mxu0 0.0
        %568 = vmatpush1.msra.mxu0 0.0
        %569 = vmatprep.subr.mxu0 0.0
        %570 = vmatpush1.msra.mxu0 0.0
        %571 = vmatprep.subr.mxu0 0.0
        %572 = vmatpush1.msra.mxu0 0.0
        %573 = vmatprep.subr.mxu0 0.0
        %574 = vmatpush1.msra.mxu0 0.0
        %575 = vmatprep.subr.mxu0 0.0
        %576 = vmatpush1.msra.mxu0 0.0
        %577 = vmatprep.subr.mxu0 0.0
        %578 = vmatpush1.msra.mxu0 0.0
        %579 = vmatprep.subr.mxu0 0.0
        %580 = vmatpush1.msra.mxu0 0.0
        %581 = vmatprep.subr.mxu0 0.0
        %582 = vmatpush1.msra.mxu0 0.0
        %583 = vmatprep.subr.mxu0 0.0
        %584 = vmatpush1.msra.mxu0 0.0
        %585 = vmatprep.subr.mxu0 0.0
        %586 = vmatpush1.msra.mxu0 0.0
        %587 = vmatprep.subr.mxu0 0.0
        %588 = vmatpush1.msra.mxu0 0.0
        %589 = vmatprep.subr.mxu0 0.0
        %590 = vmatpush1.msra.mxu0 0.0
        %591 = vmatprep.subr.mxu0 0.0
        %592 = vmatpush1.msra.mxu0 0.0
        %593 = vmatprep.subr.mxu0 0.0
        %594 = vmatpush1.msra.mxu0 0.0
        %595 = vmatprep.subr.mxu0 0.0
        %596 = vmatpush1.msra.mxu0 0.0
        %597 = vmatprep.subr.mxu0 0.0
        %598 = vmatpush1.msra.mxu0 0.0
        %599 = vmatprep.subr.mxu0 0.0
        %600 = vmatpush1.msra.mxu0 0.0
        %601 = vmatprep.subr.mxu0 0.0
        %602 = vmatpush1.msra.mxu0 0.0
        %603 = vmatprep.subr.mxu0 0.0
        %604 = vmatpush1.msra.mxu0 0.0
        %605 = vmatprep.mubr.f32.mxu0 0.0
        %606 = vmatmul.mubr.f32.gmra.mrb[0].mxu0 %v539
        %v607 = vpop.f32.mrb[0].mxu0
        %v608 = vadd.f32 0.0, %v607
        %v609 = vpop.f32.mrb[0].mxu0
        %610 = vdwg.mxu0
        %v611 = vmax.f32 %v608, 0.0
        %v612 = vld [vmem:[%s2] sm:$0xf]
        %vm613 = vcmask 31744
        %v615 = vsel %vm613, %v611, 0
        %vm617 = vcmask 1043456
        %v619 = vsel %vm617, %v612, 0
        %621 = vmatprep.subr.mxu0 0.0
        %622 = vmatpush1.msra.mxu0 %v619
        %623 = vmatprep.subr.mxu0 0.0
        %624 = vmatpush1.msra.mxu0 0.0
        %625 = vmatprep.subr.mxu0 0.0
        %626 = vmatpush1.msra.mxu0 0.0
        %627 = vmatprep.subr.mxu0 0.0
        %628 = vmatpush1.msra.mxu0 0.0
        %629 = vmatprep.subr.mxu0 0.0
        %630 = vmatpush1.msra.mxu0 0.0
        %631 = vmatprep.subr.mxu0 0.0
        %632 = vmatpush1.msra.mxu0 0.0
        %633 = vmatprep.subr.mxu0 0.0
        %634 = vmatpush1.msra.mxu0 0.0
        %635 = vmatprep.subr.mxu0 0.0
        %636 = vmatpush1.msra.mxu0 0.0
        %637 = vmatprep.subr.mxu0 0.0
        %638 = vmatpush1.msra.mxu0 0.0
        %639 = vmatprep.subr.mxu0 0.0
        %640 = vmatpush1.msra.mxu0 0.0
        %641 = vmatprep.subr.mxu0 0.0
        %642 = vmatpush1.msra.mxu0 0.0
        %643 = vmatprep.subr.mxu0 0.0
        %644 = vmatpush1.msra.mxu0 0.0
        %645 = vmatprep.subr.mxu0 0.0
        %646 = vmatpush1.msra.mxu0 0.0
        %647 = vmatprep.subr.mxu0 0.0
        %648 = vmatpush1.msra.mxu0 0.0
        %649 = vmatprep.subr.mxu0 0.0
        %650 = vmatpush1.msra.mxu0 0.0
        %651 = vmatprep.subr.mxu0 0.0
        %652 = vmatpush1.msra.mxu0 0.0
        %653 = vmatprep.subr.mxu0 0.0
        %654 = vmatpush1.msra.mxu0 0.0
        %655 = vmatprep.subr.mxu0 0.0
        %656 = vmatpush1.msra.mxu0 0.0
        %657 = vmatprep.subr.mxu0 0.0
        %658 = vmatpush1.msra.mxu0 0.0
        %659 = vmatprep.subr.mxu0 0.0
        %660 = vmatpush1.msra.mxu0 0.0
        %661 = vmatprep.subr.mxu0 0.0
        %662 = vmatpush1.msra.mxu0 0.0
        %663 = vmatprep.subr.mxu0 0.0
        %664 = vmatpush1.msra.mxu0 0.0
        %665 = vmatprep.subr.mxu0 0.0
        %666 = vmatpush1.msra.mxu0 0.0
        %667 = vmatprep.subr.mxu0 0.0
        %668 = vmatpush1.msra.mxu0 0.0
        %669 = vmatprep.subr.mxu0 0.0
        %670 = vmatpush1.msra.mxu0 0.0
        %671 = vmatprep.subr.mxu0 0.0
        %672 = vmatpush1.msra.mxu0 0.0
        %673 = vmatprep.subr.mxu0 0.0
        %674 = vmatpush1.msra.mxu0 0.0
        %675 = vmatprep.subr.mxu0 0.0
        %676 = vmatpush1.msra.mxu0 0.0
        %677 = vmatprep.subr.mxu0 0.0
        %678 = vmatpush1.msra.mxu0 0.0
        %679 = vmatprep.subr.mxu0 0.0
        %680 = vmatpush1.msra.mxu0 0.0
        %681 = vmatprep.subr.mxu0 0.0
        %682 = vmatpush1.msra.mxu0 0.0
        %683 = vmatprep.subr.mxu0 0.0
        %684 = vmatpush1.msra.mxu0 0.0
        %685 = vmatprep.mubr.f32.mxu0 0.0
        %686 = vmatmul.mubr.f32.gmra.mrb[0].mxu0 %v615
        %v687 = vpop.f32.mrb[0].mxu0
        %v688 = vadd.f32 0.0, %v687
        %v689 = vpop.f32.mrb[0].mxu0
        %690 = vdwg.mxu0
        %v691 = vxor.u32 %v688, 2147483648
        %v692 = vmul.f32 %v691, 1.442695
        %v693 = vpow.pop %v692
        %v694 = vadd.f32 %v693, 1.0
        %v695 = vrcp.pop %v694
        %v696 = vmul.f32 1.0, %v695
        %v697 = vlaneseq
        %v698 = vshrl.u32 %v697, 7
        %v699 = vsub.s32 0, %v698
        %v700 = vrot.slane %v696, %v699
        %702 = vbcast.lane.b32.xlu0 %v700, 256
        %v703 = vpop.permute.xlu0 %702
        %s705 = sor.u32 256, 8
        %706 = vbcast.lane.b32.xlu0 %v700, %s705
        %v707 = vpop.permute.xlu0 %706
        %s709 = sor.u32 256, 16
        %710 = vbcast.lane.b32.xlu0 %v700, %s709
        %v711 = vpop.permute.xlu0 %710
        %s713 = sor.u32 256, 24
        %714 = vbcast.lane.b32.xlu0 %v700, %s713
        %v715 = vpop.permute.xlu0 %714
        %s717 = sor.u32 256, 32
        %718 = vbcast.lane.b32.xlu0 %v700, %s717
        %v719 = vpop.permute.xlu0 %718
        %s721 = sor.u32 256, 40
        %722 = vbcast.lane.b32.xlu0 %v700, %s721
        %v723 = vpop.permute.xlu0 %722
        %s725 = sor.u32 256, 48
        %726 = vbcast.lane.b32.xlu0 %v700, %s725
        %v727 = vpop.permute.xlu0 %726
        %s729 = sor.u32 256, 56
        %730 = vbcast.lane.b32.xlu0 %v700, %s729
        %v731 = vpop.permute.xlu0 %730
        %v732 = vlaneseq
        %v733 = vshrl.u32 %v732, 7
        %v734 = vsub.s32 1, %v733
        %v735 = vrot.slane %v696, %v734
        %737 = vbcast.lane.b32.xlu0 %v735, 256
        %v738 = vpop.permute.xlu0 %737
        %s740 = sor.u32 256, 8
        %741 = vbcast.lane.b32.xlu0 %v735, %s740
        %v742 = vpop.permute.xlu0 %741
        %s744 = sor.u32 256, 16
        %745 = vbcast.lane.b32.xlu0 %v735, %s744
        %v746 = vpop.permute.xlu0 %745
        %s748 = sor.u32 256, 24
        %749 = vbcast.lane.b32.xlu0 %v735, %s748
        %v750 = vpop.permute.xlu0 %749
        %s752 = sor.u32 256, 32
        %753 = vbcast.lane.b32.xlu0 %v735, %s752
        %v754 = vpop.permute.xlu0 %753
        %s756 = sor.u32 256, 40
        %757 = vbcast.lane.b32.xlu0 %v735, %s756
        %v758 = vpop.permute.xlu0 %757
        %s760 = sor.u32 256, 48
        %761 = vbcast.lane.b32.xlu0 %v735, %s760
        %v762 = vpop.permute.xlu0 %761
        %s764 = sor.u32 256, 56
        %765 = vbcast.lane.b32.xlu0 %v735, %s764
        %v766 = vpop.permute.xlu0 %765
        %v767 = vlaneseq
        %v768 = vshrl.u32 %v767, 7
        %v769 = vsub.s32 2, %v768
        %v770 = vrot.slane %v696, %v769
        %772 = vbcast.lane.b32.xlu0 %v770, 256
        %v773 = vpop.permute.xlu0 %772
        %s775 = sor.u32 256, 8
        %776 = vbcast.lane.b32.xlu0 %v770, %s775
        %v777 = vpop.permute.xlu0 %776
        %s779 = sor.u32 256, 16
        %780 = vbcast.lane.b32.xlu0 %v770, %s779
        %v781 = vpop.permute.xlu0 %780
        %s783 = sor.u32 256, 24
        %784 = vbcast.lane.b32.xlu0 %v770, %s783
        %v785 = vpop.permute.xlu0 %784
        %s787 = sor.u32 256, 32
        %788 = vbcast.lane.b32.xlu0 %v770, %s787
        %v789 = vpop.permute.xlu0 %788
        %s791 = sor.u32 256, 40
        %792 = vbcast.lane.b32.xlu0 %v770, %s791
        %v793 = vpop.permute.xlu0 %792
        %s795 = sor.u32 256, 48
        %796 = vbcast.lane.b32.xlu0 %v770, %s795
        %v797 = vpop.permute.xlu0 %796
        %s799 = sor.u32 256, 56
        %800 = vbcast.lane.b32.xlu0 %v770, %s799
        %v801 = vpop.permute.xlu0 %800
        %v802 = vlaneseq
        %v803 = vshrl.u32 %v802, 7
        %v804 = vsub.s32 3, %v803
        %v805 = vrot.slane %v696, %v804
        %807 = vbcast.lane.b32.xlu0 %v805, 256
        %v808 = vpop.permute.xlu0 %807
        %s810 = sor.u32 256, 8
        %811 = vbcast.lane.b32.xlu0 %v805, %s810
        %v812 = vpop.permute.xlu0 %811
        %s814 = sor.u32 256, 16
        %815 = vbcast.lane.b32.xlu0 %v805, %s814
        %v816 = vpop.permute.xlu0 %815
        %s818 = sor.u32 256, 24
        %819 = vbcast.lane.b32.xlu0 %v805, %s818
        %v820 = vpop.permute.xlu0 %819
        %s822 = sor.u32 256, 32
        %823 = vbcast.lane.b32.xlu0 %v805, %s822
        %v824 = vpop.permute.xlu0 %823
        %s826 = sor.u32 256, 40
        %827 = vbcast.lane.b32.xlu0 %v805, %s826
        %v828 = vpop.permute.xlu0 %827
        %s830 = sor.u32 256, 48
        %831 = vbcast.lane.b32.xlu0 %v805, %s830
        %v832 = vpop.permute.xlu0 %831
        %s834 = sor.u32 256, 56
        %835 = vbcast.lane.b32.xlu0 %v805, %s834
        %v836 = vpop.permute.xlu0 %835
        %v837 = vmul.f32 %v192, %v703
        %v838 = vmul.f32 %v193, %v707
        %v839 = vmul.f32 %v194, %v711
        %v840 = vmul.f32 %v195, %v715
        %v841 = vmul.f32 %v196, %v719
        %v842 = vmul.f32 %v197, %v723
        %v843 = vmul.f32 %v198, %v727
        %v844 = vmul.f32 %v199, %v731
        %v845 = vmul.f32 %v200, %v738
        %v846 = vmul.f32 %v201, %v742
        %v847 = vmul.f32 %v202, %v746
        %v848 = vmul.f32 %v203, %v750
        %v849 = vmul.f32 %v204, %v754
        %v850 = vmul.f32 %v205, %v758
        %v851 = vmul.f32 %v206, %v762
        %v852 = vmul.f32 %v207, %v766
        %v853 = vmul.f32 %v208, %v773
        %v854 = vmul.f32 %v209, %v777
        %v855 = vmul.f32 %v210, %v781
        %v856 = vmul.f32 %v211, %v785
        %v857 = vmul.f32 %v212, %v789
        %v858 = vmul.f32 %v213, %v793
        %v859 = vmul.f32 %v214, %v797
        %v860 = vmul.f32 %v215, %v801
        %v861 = vmul.f32 %v216, %v808
        %v862 = vmul.f32 %v217, %v812
        %v863 = vmul.f32 %v218, %v816
        %v864 = vmul.f32 %v219, %v820
        %v865 = vmul.f32 %v220, %v824
        %v866 = vmul.f32 %v221, %v828
        %v867 = vmul.f32 %v222, %v832
        %v868 = vmul.f32 %v223, %v836
        %869 = vst [vmem:[%s189] sm:$0xff] %v837
        %870 = vst [vmem:[%s189 + $0x8] sm:$0xff] %v838
        %871 = vst [vmem:[%s189 + $0x10] sm:$0xff] %v839
        %872 = vst [vmem:[%s189 + $0x18] sm:$0xff] %v840
        %873 = vst [vmem:[%s189 + $0x20] sm:$0xff] %v841
        %874 = vst [vmem:[%s189 + $0x28] sm:$0xff] %v842
        %875 = vst [vmem:[%s189 + $0x30] sm:$0xff] %v843
        %876 = vst [vmem:[%s189 + $0x38] sm:$0xff] %v844
        %877 = vst [vmem:[%s189 + $0x40] sm:$0xff] %v845
        %878 = vst [vmem:[%s189 + $0x48] sm:$0xff] %v846
        %879 = vst [vmem:[%s189 + $0x50] sm:$0xff] %v847
        %880 = vst [vmem:[%s189 + $0x58] sm:$0xff] %v848
        %881 = vst [vmem:[%s189 + $0x60] sm:$0xff] %v849
        %882 = vst [vmem:[%s189 + $0x68] sm:$0xff] %v850
        %883 = vst [vmem:[%s189 + $0x70] sm:$0xff] %v851
        %884 = vst [vmem:[%s189 + $0x78] sm:$0xff] %v852
        %885 = vst [vmem:[%s189 + $0x80] sm:$0xff] %v853
        %886 = vst [vmem:[%s189 + $0x88] sm:$0xff] %v854
        %887 = vst [vmem:[%s189 + $0x90] sm:$0xff] %v855
        %888 = vst [vmem:[%s189 + $0x98] sm:$0xff] %v856
        %889 = vst [vmem:[%s189 + $0xa0] sm:$0xff] %v857
        %890 = vst [vmem:[%s189 + $0xa8] sm:$0xff] %v858
        %891 = vst [vmem:[%s189 + $0xb0] sm:$0xff] %v859
        %892 = vst [vmem:[%s189 + $0xb8] sm:$0xff] %v860
        %893 = vst [vmem:[%s189 + $0xc0] sm:$0xff] %v861
        %894 = vst [vmem:[%s189 + $0xc8] sm:$0xff] %v862
        %895 = vst [vmem:[%s189 + $0xd0] sm:$0xff] %v863
        %896 = vst [vmem:[%s189 + $0xd8] sm:$0xff] %v864
        %897 = vst [vmem:[%s189 + $0xe0] sm:$0xff] %v865
        %898 = vst [vmem:[%s189 + $0xe8] sm:$0xff] %v866
        %899 = vst [vmem:[%s189 + $0xf0] sm:$0xff] %v867
        %900 = vst [vmem:[%s189 + $0xf8] sm:$0xff] %v868
        %s901 = sand.u32 %s96, 1
        %s902 = scalar_lea.sflag [#allocation4], %s901
        %s903 = sand.u32 %s96, 1
        %s904 = smul.addr %s903, 256
        %s905 = scalar_lea.vmem [#allocation5], %s904
        // Predicated region
        $region37: #{tpu_custom_call.1} parent=31 // pred_check
          %p906 = pneg %p106
        $region38: #{tpu_custom_call.1} parent=31 // pred_check_branch
          %908 = sbr.rel (%p906) target = $region40
        $region39: #{tpu_custom_call.1} parent=31 // pred_region
          %s909 = smul.u32 4, %s20
          %s911 = ssub.s32 4096, 4096
          %912 = vsyncadd %s902, %s911
          %s913 = smul.addr %s909, 8
          %s914 = smul.addr %s913, 128
          %s915 = scalar_lea.hbm %s3, %s914
          %s916 = sshll.u32 %s905, 4
          %s917 = int_to_ptr.vmem [resolvable:$true] %s916
          %922 = dma.vmem_to_hbm [thread:$0]  %s917, 4096, %s915, %s902, 128, 128, 8
        $region40: #{tpu_custom_call.1} parent=31 // pred_fallthru
          _
      $region32: #{tpu_custom_call.1} parent=5 // pred_fallthru
        _
      %p923 = scmp.le.s32.totalorder 2, %s15
      // Predicated region
      $region41: #{tpu_custom_call.1} parent=5 // pred_check
        %p924 = pneg %p923
      $region42: #{tpu_custom_call.1} parent=5 // pred_check_branch
        %926 = sbr.rel (%p924) target = $region44
      $region43: #{tpu_custom_call.1} parent=5 // pred_region
        %s927 = ssub.s32 %s15, 2
        // Predicated region
        $region45: #{tpu_custom_call.1} parent=43 // pred_check
          %p928 = pneg %p112
        $region46: #{tpu_custom_call.1} parent=43 // pred_check_branch
          %930 = sbr.rel (%p928) target = $region48
        $region47: #{tpu_custom_call.1} parent=43 // pred_region
          %s931 = sand.u32 %s97, 1
          %s932 = scalar_lea.sflag [#allocation4], %s931
          %s933 = sand.u32 %s97, 1
          %s934 = smul.addr %s933, 256
          %s935 = scalar_lea.vmem [#allocation5], %s934
          %936 = dma.done %s932, 4096
        $region48: #{tpu_custom_call.1} parent=43 // pred_fallthru
          _
      $region44: #{tpu_custom_call.1} parent=5 // pred_fallthru
        _
    $region6: #{tpu_custom_call.1} parent=1 // loop_footer
      %s19 = sadd.s32 1, %s15
    $region7: #{tpu_custom_call.1} parent=1 // loop_footer_branch
      %14 = sbr.rel target = $region3
    $region8: #{tpu_custom_call.1} parent=1 // loop_exit
      _
    %937 = vsyncpa [#allocation3], 1
    %s938 = scalar_lea.sflag [#allocation3], 1
    %939 = vsyncpa %s938, 1
    %940 = vsyncpa [#allocation4], 1
    %s941 = scalar_lea.sflag [#allocation4], 1
    %942 = vsyncpa %s941, 1

</llo_original>
